<compile_context>
chip_gen: v7x
topology: tpu7x:2x2x1
jax: 0.10.0
libtpu: 0.0.40
codegen_flags: <defaults>
</compile_context>

<pallas_src>
import jax
import jax.numpy as jnp
from jax.experimental import pallas as pl
from jax.experimental.pallas import tpu as pltpu


def _round_up(x, m):
    return ((x + m - 1) // m) * m


def _discriminator_kernel(f_ref, ws_ref, o_ref):
    f = f_ref[...]
    ws = ws_ref[...]
    if f.dtype != ws.dtype:
        # bf16 feature stream: upcast the tile in-register, accumulate in f32.
        f = f.astype(ws.dtype)
    o_ref[...] = jnp.dot(
        f, ws, preferred_element_type=jnp.float32
    ).astype(o_ref.dtype)


def discriminator_forward(features, weight, summary, *, tm=None,
                          min_pallas_bytes=1 << 20, force_pallas=False):
    """features: [N, H], weight: [H, H] f32, summary: [H] f32 -> [N] f32."""
    N, H = features.shape
    assert weight.shape == (H, H)
    assert summary.shape == (H,)

    # Hoist the H x H GEMV out of the kernel (XLA handles it fine); only the
    # [H, 1] result enters the Pallas kernel.
    ws = jnp.matmul(weight.astype(jnp.float32),
                    summary.astype(jnp.float32)).reshape(H, 1)

    itemsize = features.dtype.itemsize
    feat_bytes = N * H * itemsize

    # Pure-XLA fallback for tiny inputs: pallas_call launch + single-step grid
    # overhead dominates there.
    if feat_bytes < min_pallas_bytes and not force_pallas:
        return jnp.matmul(features, ws)[:, 0]

    # ---- tile selection: ~4 MiB of feature rows per grid step --------------
    row_bytes = H * itemsize
    if tm is None:
        target_tile_bytes = 4 << 20
        tm = max(8, (target_tile_bytes // row_bytes) // 8 * 8)
    tm = max(8, (int(tm) // 8) * 8)          # sublane multiple
    tm = min(tm, _round_up(N, 8))            # never bigger than (rounded) N
    max_tile_bytes = 8 << 20                 # 2x double-buffer stays v7x-safe
    if tm * row_bytes > max_tile_bytes:
        tm = max(8, (max_tile_bytes // row_bytes) // 8 * 8)

    grid = (pl.cdiv(N, tm),)

    # ---- hardware-aware VMEM budget ----------------------------------------
    try:
        vmem_cap = int(pltpu.get_tpu_info().vmem_capacity_bytes)
    except Exception:
        vmem_cap = 64 << 20                  # conservative (v7x per-core)
    needed = 2 * tm * row_bytes + 2 * tm * 4 + H * 4 + (4 << 20)
    vmem_limit = min(max(needed, 32 << 20), int(0.75 * vmem_cap))

    out = pl.pallas_call(
        _discriminator_kernel,
        out_shape=jax.ShapeDtypeStruct((N, 1), jnp.float32),
        grid_spec=pl.GridSpec(
            grid=grid,
            in_specs=[
                # features tile: [tm, H] (full H, no pad), walks over N.
                pl.BlockSpec((tm, H), lambda i: (i, 0)),
                # ws: constant block -> stays resident across grid steps.
                pl.BlockSpec((H, 1), lambda i: (0, 0)),
            ],
            out_specs=pl.BlockSpec((tm, 1), lambda i: (i, 0)),
        ),
        compiler_params=pltpu.CompilerParams(
            # N axis is independent across tiles; on v7x this lets the grid
            # shard across the two TensorCores, elsewhere it is neutral.
            dimension_semantics=(pltpu.PARALLEL,),
            vmem_limit_bytes=int(vmem_limit),
        ),
        cost_estimate=pl.CostEstimate(
            flops=2 * N * H,
            transcendentals=0,
            bytes_accessed=N * row_bytes + H * 4 + N * 4,
        ),
    )(features, ws)

    return out[:, 0]


def init_discriminator_weight(key, n_hidden, dtype=jnp.float32):
    # Matches reset_parameters: uniform(-1/sqrt(n_hidden), 1/sqrt(n_hidden))
    bound = 1.0 / jnp.sqrt(jnp.asarray(n_hidden, dtype=jnp.float32))
    return jax.random.uniform(
        key, (n_hidden, n_hidden), dtype=dtype, minval=-bound, maxval=bound)


if __name__ == "__main__":
    n_hidden = 32
    n_nodes = 8

    key = jax.random.PRNGKey(0)
    k_w, k_f, k_s = jax.random.split(key, 3)

    weight = init_discriminator_weight(k_w, n_hidden)
    features = jax.random.normal(k_f, (n_nodes, n_hidden), dtype=jnp.float32)
    summary = jax.random.normal(k_s, (n_hidden,), dtype=jnp.float32)

    ref = features @ (weight @ summary)

    # 1) Pallas path forced at the demo size (single block, H=32 < 128).
    out = jax.block_until_ready(
        discriminator_forward(features, weight, summary, force_pallas=True))
    assert out.shape == (n_nodes,)
    assert jnp.allclose(out, ref, atol=1e-4, rtol=1e-4), (out, ref)

    # 2) Default dispatch at this size takes the tiny-input XLA fallback.
    out_fb = jax.block_until_ready(
        discriminator_forward(features, weight, summary))
    assert jnp.allclose(out_fb, ref, atol=1e-4, rtol=1e-4)

    # 3) Ragged multi-tile N: partial last block, no wrapper-side padding.
    n_big = 1000
    feats_big = jax.random.normal(jax.random.PRNGKey(1), (n_big, n_hidden),
                                  dtype=jnp.float32)
    ref_big = feats_big @ (weight @ summary)
    out_big = jax.block_until_ready(
        discriminator_forward(feats_big, weight, summary, tm=256,
                              force_pallas=True))
    assert out_big.shape == (n_big,)
    assert jnp.allclose(out_big, ref_big, atol=1e-3, rtol=1e-3)

    # 4) Odd hidden size (H not a multiple of 128) with auto tile selection.
    h_odd = 160
    w_odd = init_discriminator_weight(jax.random.PRNGKey(2), h_odd)
    s_odd = jax.random.normal(jax.random.PRNGKey(3), (h_odd,), dtype=jnp.float32)
    f_odd = jax.random.normal(jax.random.PRNGKey(4), (300, h_odd),
                              dtype=jnp.float32)
    ref_odd = f_odd @ (w_odd @ s_odd)
    out_odd = jax.block_until_ready(
        discriminator_forward(f_odd, w_odd, s_odd, force_pallas=True))
    assert jnp.allclose(out_odd, ref_odd, atol=1e-3, rtol=1e-3)

    # 5) Optional bf16 feature stream (halves HBM traffic; looser tolerance).
    out_bf = jax.block_until_ready(
        discriminator_forward(feats_big.astype(jnp.bfloat16), weight, summary,
                              tm=256, force_pallas=True))
    assert jnp.allclose(out_bf, ref_big, atol=2.5e-1, rtol=5e-2)

    print("KERNEL_OK")
</pallas_src>

<mosaic_0001>
module attributes {stable_mosaic.version = 11 : i64} {
  func.func @_discriminator_kernel(%arg0: i32, %arg1: memref<8x32xf32, #tpu.memory_space<vmem>>, %arg2: memref<32x1xf32, #tpu.memory_space<vmem>>, %arg3: memref<8x1xf32, #tpu.memory_space<vmem>>) attributes {dimension_semantics = [#tpu.dimension_semantics<parallel>], iteration_bounds = array<i64: 1>, scalar_prefetch = 0 : i64, scratch_operands = 0 : i64, tpu.core_type = #tpu.core_type<tc>, window_params = [{transform_indices = @transform_0, window_bounds = array<i64: 8, 32>}, {pipeline_mode = #tpu.pipeline_mode<synchronous>, transform_indices = @transform_1, window_bounds = array<i64: 32, 1>}, {transform_indices = @transform_2, window_bounds = array<i64: 8, 1>}]} {
    %c0 = arith.constant 0 : index
    %c0_0 = arith.constant 0 : index
    %0 = vector.load %arg1[%c0, %c0_0] : memref<8x32xf32, #tpu.memory_space<vmem>>, vector<8x32xf32>
    %c0_1 = arith.constant 0 : index
    %c0_2 = arith.constant 0 : index
    %1 = vector.load %arg2[%c0_1, %c0_2] : memref<32x1xf32, #tpu.memory_space<vmem>>, vector<32x1xf32>
    %cst = arith.constant dense<0.000000e+00> : vector<8x1xf32>
    %2 = tpu.matmul %0, %1, %cst {dimension_numbers = #tpu.dot_dimension_numbers<[1], [0], [0], [1], [0, 0, 1, 1], [], []>} : vector<8x32xf32>, vector<32x1xf32>, vector<8x1xf32> -> vector<8x1xf32>
    %c0_3 = arith.constant 0 : index
    %c0_4 = arith.constant 0 : index
    %3 = vector.load %arg3[%c0_3, %c0_4] : memref<8x1xf32, #tpu.memory_space<vmem>>, vector<8x1xf32>
    tpu.vector_store %arg3[%c0_3, %c0_4], %2 {strides = array<i32>} : memref<8x1xf32, #tpu.memory_space<vmem>>, vector<8x1xf32>,
    return
  }
  func.func @transform_0(%arg0: i32) -> (i32, i32) {
    %c0_i32 = arith.constant 0 : i32
    %c0_i32_0 = arith.constant 0 : i32
    return %arg0, %c0_i32 : i32, i32
  }
  func.func @transform_1(%arg0: i32) -> (i32, i32) {
    %c0_i32 = arith.constant 0 : i32
    %c0_i32_0 = arith.constant 0 : i32
    %c0_i32_1 = arith.constant 0 : i32
    return %c0_i32, %c0_i32_0 : i32, i32
  }
  func.func @transform_2(%arg0: i32) -> (i32, i32) {
    %c0_i32 = arith.constant 0 : i32
    %c0_i32_0 = arith.constant 0 : i32
    return %arg0, %c0_i32 : i32, i32
  }
}

</mosaic_0001>

<llo_original>
// kernel: tpu_custom_call.1
$region0: #{tpu_custom_call.1}
  #allocation0 [shape = 'u32[]', space=smem, size = 0x4, offset = 0x4, fixed_abs, tag = 'smem constant byte address 0x4 - core index']
  #allocation1 [shape = 'u32[144,128]{1,0:T(1,128)}', space=vmem, size = 0x12000, scoped, tag = 'internal scratch']
  %s0 = inlined_call_operand.vmem [shape: f32[8,32], index: 0, kind: input, shape index: {}]
  %s1 = inlined_call_operand.vmem [shape: f32[32,1], index: 1, kind: input, shape index: {}]
  %s2 = inlined_call_operand.vmem [shape: f32[8,1], index: 2, kind: output, shape index: {}]
  %s3 = sld [smem:[#allocation0]]
  $region18: #{tpu_custom_call.1} parent=0
    _
  %s5 = ssub.s32 1, %s3
  %s6 = scalar_select 0, %s5, %s3
  // Predicated region
  $region2: #{tpu_custom_call.1} parent=0 // pred_check
    _
  $region3: #{tpu_custom_call.1} parent=0 // pred_check_branch
    %8 = sbr.rel (0) target = $region5
  $region4: #{tpu_custom_call.1} parent=0 // pred_region
    _
  $region5: #{tpu_custom_call.1} parent=0 // pred_fallthru
    _
  // Predicated region
  $region6: #{tpu_custom_call.1} parent=0 // pred_check
    _
  $region7: #{tpu_custom_call.1} parent=0 // pred_check_branch
    %10 = sbr.rel (0) target = $region9
  $region8: #{tpu_custom_call.1} parent=0 // pred_region
    _
  $region9: #{tpu_custom_call.1} parent=0 // pred_fallthru
    _
  %v11 = vld [vmem:[%s0] sm:$0xff]
  %v12 = vld [vmem:[%s1] sm:$0xff]
  %v13 = vld [vmem:[%s1 + $0x8] sm:$0xff]
  %v14 = vld [vmem:[%s1 + $0x10] sm:$0xff]
  %v15 = vld [vmem:[%s1 + $0x18] sm:$0xff]
  %vm16 = vcmask 261120
  %v18 = vsel %vm16, %v11, 0
  %20 = vmatprep.subr.mxu0 0.0
  %21 = vmatpush1.msra.mxu0 %v12
  %22 = vmatprep.subr.mxu0 0.0
  %23 = vmatpush1.msra.mxu0 %v13
  %24 = vmatprep.subr.mxu0 0.0
  %25 = vmatpush1.msra.mxu0 %v14
  %26 = vmatprep.subr.mxu0 0.0
  %27 = vmatpush1.msra.mxu0 %v15
  %28 = vmatprep.subr.mxu0 0.0
  %29 = vmatpush1.msra.mxu0 0.0
  %30 = vmatprep.subr.mxu0 0.0
  %31 = vmatpush1.msra.mxu0 0.0
  %32 = vmatprep.subr.mxu0 0.0
  %33 = vmatpush1.msra.mxu0 0.0
  %34 = vmatprep.subr.mxu0 0.0
  %35 = vmatpush1.msra.mxu0 0.0
  %36 = vmatprep.subr.mxu0 0.0
  %37 = vmatpush1.msra.mxu0 0.0
  %38 = vmatprep.subr.mxu0 0.0
  %39 = vmatpush1.msra.mxu0 0.0
  %40 = vmatprep.subr.mxu0 0.0
  %41 = vmatpush1.msra.mxu0 0.0
  %42 = vmatprep.subr.mxu0 0.0
  %43 = vmatpush1.msra.mxu0 0.0
  %44 = vmatprep.subr.mxu0 0.0
  %45 = vmatpush1.msra.mxu0 0.0
  %46 = vmatprep.subr.mxu0 0.0
  %47 = vmatpush1.msra.mxu0 0.0
  %48 = vmatprep.subr.mxu0 0.0
  %49 = vmatpush1.msra.mxu0 0.0
  %50 = vmatprep.subr.mxu0 0.0
  %51 = vmatpush1.msra.mxu0 0.0
  %52 = vmatprep.subr.mxu0 0.0
  %53 = vmatpush1.msra.mxu0 0.0
  %54 = vmatprep.subr.mxu0 0.0
  %55 = vmatpush1.msra.mxu0 0.0
  %56 = vmatprep.subr.mxu0 0.0
  %57 = vmatpush1.msra.mxu0 0.0
  %58 = vmatprep.subr.mxu0 0.0
  %59 = vmatpush1.msra.mxu0 0.0
  %60 = vmatprep.subr.mxu0 0.0
  %61 = vmatpush1.msra.mxu0 0.0
  %62 = vmatprep.subr.mxu0 0.0
  %63 = vmatpush1.msra.mxu0 0.0
  %64 = vmatprep.subr.mxu0 0.0
  %65 = vmatpush1.msra.mxu0 0.0
  %66 = vmatprep.subr.mxu0 0.0
  %67 = vmatpush1.msra.mxu0 0.0
  %68 = vmatprep.subr.mxu0 0.0
  %69 = vmatpush1.msra.mxu0 0.0
  %70 = vmatprep.subr.mxu0 0.0
  %71 = vmatpush1.msra.mxu0 0.0
  %72 = vmatprep.subr.mxu0 0.0
  %73 = vmatpush1.msra.mxu0 0.0
  %74 = vmatprep.subr.mxu0 0.0
  %75 = vmatpush1.msra.mxu0 0.0
  %76 = vmatprep.subr.mxu0 0.0
  %77 = vmatpush1.msra.mxu0 0.0
  %78 = vmatprep.subr.mxu0 0.0
  %79 = vmatpush1.msra.mxu0 0.0
  %80 = vmatprep.subr.mxu0 0.0
  %81 = vmatpush1.msra.mxu0 0.0
  %82 = vmatprep.subr.mxu0 0.0
  %83 = vmatpush1.msra.mxu0 0.0
  %84 = vmatprep.mubr.f32.mxu0 0.0
  %85 = vmatmul.mubr.f32.gmra.mrb[0].mxu0 %v18
  %v86 = vpop.f32.mrb[0].mxu0
  %v87 = vadd.f32 0.0, %v86
  %v88 = vpop.f32.mrb[0].mxu0
  %89 = vdwg.mxu0
  %vm90 = vcmask 7168
  %91 = vst.msk [vmem:[%s2] sm:$0xff] %vm90, %v87
  // Predicated region
  $region10: #{tpu_custom_call.1} parent=0 // pred_check
    _
  $region11: #{tpu_custom_call.1} parent=0 // pred_check_branch
    %93 = sbr.rel (0) target = $region13
  $region12: #{tpu_custom_call.1} parent=0 // pred_region
    _
  $region13: #{tpu_custom_call.1} parent=0 // pred_fallthru
    _
  // Predicated region
  $region14: #{tpu_custom_call.1} parent=0 // pred_check
    _
  $region15: #{tpu_custom_call.1} parent=0 // pred_check_branch
    %95 = sbr.rel (0) target = $region17
  $region16: #{tpu_custom_call.1} parent=0 // pred_region
    _
  $region17: #{tpu_custom_call.1} parent=0 // pred_fallthru
    _

</llo_original>
